<compile_context>
chip_gen: v7x
topology: tpu7x:2x2x1
jax: 0.10.0
libtpu: 0.0.40
codegen_flags: <defaults>
</compile_context>

<pallas_src>
import functools

import jax
import jax.numpy as jnp
from jax.experimental import pallas as pl
from jax.experimental.pallas import tpu as pltpu

NEG_INF = -1e30     # "minus infinity" for the padded class columns (f32-safe)
CLASS_PAD = 128     # pad logits lane dim to one full 128-lane tile
MAX_TM = 512        # batch tile (rows); fits VMEM with headroom on v5e/v6e/v7x


def mlp_kernel(x_ref, w1_ref, b1_ref, w2_ref, b2_ref, w3_ref, b3_ref,
               w4_ref, b4_ref, o_ref):
    # x_ref and all w*_ref are bf16; dots accumulate in f32 on the MXU.
    h = jnp.dot(x_ref[...], w1_ref[...],
                preferred_element_type=jnp.float32) + b1_ref[...]
    h = jnp.maximum(h, 0.0)
    h = jnp.dot(h.astype(jnp.bfloat16), w2_ref[...],
                preferred_element_type=jnp.float32) + b2_ref[...]
    h = jnp.maximum(h, 0.0)
    h = jnp.dot(h.astype(jnp.bfloat16), w3_ref[...],
                preferred_element_type=jnp.float32) + b3_ref[...]
    h = jnp.maximum(h, 0.0)
    # w4/b4 are padded to CLASS_PAD columns; padded bias columns are NEG_INF,
    # so exp(padded - max) == 0 and the logsumexp below is exact over the real classes.
    logits = jnp.dot(h.astype(jnp.bfloat16), w4_ref[...],
                     preferred_element_type=jnp.float32) + b4_ref[...]
    # LogSoftmax over dim=1 (classes); max/sum go to the XLU, exp to the EUP,
    # so the epilogue hides under the matmuls.
    m = jnp.max(logits, axis=1, keepdims=True)
    z = logits - m
    lse = jnp.log(jnp.sum(jnp.exp(z), axis=1, keepdims=True))
    o_ref[...] = (z - lse).astype(o_ref.dtype)


def prepare_params(params, num_classes):
    """One-time parameter prep (hoisted out of the per-call path):
    transpose nn.Linear weights to (in, out), cast to bf16, keep biases f32
    as (1, out), and pad the last layer's class dimension to CLASS_PAD lanes."""
    assert num_classes <= CLASS_PAD
    p = {}
    for i in (1, 2, 3):
        p[f"w{i}"] = params[f"w{i}"].T.astype(jnp.bfloat16)
        p[f"b{i}"] = params[f"b{i}"].astype(jnp.float32)[None, :]
    w4 = params["w4"].T.astype(jnp.bfloat16)          # (third_hidden, num_classes)
    b4 = params["b4"].astype(jnp.float32)
    pad = CLASS_PAD - num_classes
    p["w4"] = jnp.pad(w4, ((0, 0), (0, pad)))
    p["b4"] = jnp.pad(b4, ((0, pad),), constant_values=NEG_INF)[None, :]
    return p


@functools.partial(jax.jit, static_argnames=("num_classes",))
def net_forward(x_nchw, prepared, num_classes):
    """x_nchw: (N, depth, H, W) float32. prepared: output of prepare_params."""
    n = x_nchw.shape[0]
    # matches PyTorch x.view(num_examples, -1); cast to bf16 to halve activation DMA
    x_flat = x_nchw.reshape(n, -1).astype(jnp.bfloat16)
    in_features = x_flat.shape[1]

    # batch tile: multiple of 8 sublanes, capped at MAX_TM; pad batch to a tile multiple
    tm = MAX_TM if n >= MAX_TM else max(8, -(-n // 8) * 8)
    padded_n = -(-n // tm) * tm
    if padded_n != n:
        x_flat = jnp.pad(x_flat, ((0, padded_n - n), (0, 0)))

    h1 = prepared["w1"].shape[1]
    h2 = prepared["w2"].shape[1]
    h3 = prepared["w3"].shape[1]

    def resident(shape):
        # weights/biases: same block for every grid step -> stays VMEM-resident
        return pl.BlockSpec(shape, lambda i: (0, 0))

    out = pl.pallas_call(
        mlp_kernel,
        out_shape=jax.ShapeDtypeStruct((padded_n, CLASS_PAD), jnp.float32),
        grid=(padded_n // tm,),
        in_specs=[
            pl.BlockSpec((tm, in_features), lambda i: (i, 0)),   # x: tiled over batch
            resident((in_features, h1)), resident((1, h1)),
            resident((h1, h2)),          resident((1, h2)),
            resident((h2, h3)),          resident((1, h3)),
            resident((h3, CLASS_PAD)),   resident((1, CLASS_PAD)),
        ],
        out_specs=pl.BlockSpec((tm, CLASS_PAD), lambda i: (i, 0)),
        compiler_params=pltpu.CompilerParams(
            dimension_semantics=("parallel",)),   # megacore split on v7x
    )(x_flat, prepared["w1"], prepared["b1"], prepared["w2"], prepared["b2"],
      prepared["w3"], prepared["b3"], prepared["w4"], prepared["b4"])

    return out[:n, :num_classes]


def init_linear(key, in_features, out_features):
    """Deterministic init mimicking nn.Linear default (uniform +-1/sqrt(in))."""
    kw, kb = jax.random.split(key)
    bound = 1.0 / jnp.sqrt(jnp.float32(in_features))
    w = jax.random.uniform(kw, (out_features, in_features), jnp.float32, -bound, bound)
    b = jax.random.uniform(kb, (out_features,), jnp.float32, -bound, bound)
    return w, b


def reference_forward(x_nchw, params):
    """Pure-JAX f32 reference of the PyTorch forward (for correctness check)."""
    n = x_nchw.shape[0]
    h = x_nchw.reshape(n, -1)
    h = jnp.maximum(h @ params["w1"].T + params["b1"], 0.0)
    h = jnp.maximum(h @ params["w2"].T + params["b2"], 0.0)
    h = jnp.maximum(h @ params["w3"].T + params["b3"], 0.0)
    logits = h @ params["w4"].T + params["b4"]
    return jax.nn.log_softmax(logits, axis=1)


if __name__ == "__main__":
    # Small shapes implied by the module's forward:
    batch = 2
    depth = 3            # params.depth (channels)
    img_dimension = 16   # params.img_dimension
    first_hidden = 128
    second_hidden = 64
    third_hidden = 32
    num_classes = 5

    in_features = img_dimension * img_dimension * depth  # 768

    key = jax.random.PRNGKey(0)
    k_x, k1, k2, k3, k4 = jax.random.split(key, 5)

    x = jax.random.normal(k_x, (batch, depth, img_dimension, img_dimension), jnp.float32)

    w1, b1 = init_linear(k1, in_features, first_hidden)
    w2, b2 = init_linear(k2, first_hidden, second_hidden)
    w3, b3 = init_linear(k3, second_hidden, third_hidden)
    w4, b4 = init_linear(k4, third_hidden, num_classes)

    params = {"w1": w1, "b1": b1, "w2": w2, "b2": b2,
              "w3": w3, "b3": b3, "w4": w4, "b4": b4}

    prepared = prepare_params(params, num_classes)   # one-time prep (transpose/cast/pad)

    out = net_forward(x, prepared, num_classes)
    out = jax.block_until_ready(out)

    assert out.shape == (batch, num_classes)
    # log-softmax rows should (log-)sum to ~0 over the real classes
    row_logsumexp = jax.nn.logsumexp(out, axis=1)
    assert jnp.all(jnp.abs(row_logsumexp) < 1e-4)
    # compare against a pure-JAX f32 reference (loose tol for bf16 matmul operands)
    ref = reference_forward(x, params)
    assert jnp.max(jnp.abs(out - ref)) < 1e-1

    print("KERNEL_OK")
</pallas_src>

<mosaic_0001>
module attributes {stable_mosaic.version = 11 : i64} {
  func.func @mlp_kernel(%arg0: i32, %arg1: memref<8x768xbf16, #tpu.memory_space<vmem>>, %arg2: memref<768x128xbf16, #tpu.memory_space<vmem>>, %arg3: memref<1x128xf32, #tpu.memory_space<vmem>>, %arg4: memref<128x64xbf16, #tpu.memory_space<vmem>>, %arg5: memref<1x64xf32, #tpu.memory_space<vmem>>, %arg6: memref<64x32xbf16, #tpu.memory_space<vmem>>, %arg7: memref<1x32xf32, #tpu.memory_space<vmem>>, %arg8: memref<32x128xbf16, #tpu.memory_space<vmem>>, %arg9: memref<1x128xf32, #tpu.memory_space<vmem>>, %arg10: memref<8x128xf32, #tpu.memory_space<vmem>>) attributes {dimension_semantics = [#tpu.dimension_semantics<parallel>], iteration_bounds = array<i64: 1>, scalar_prefetch = 0 : i64, scratch_operands = 0 : i64, tpu.core_type = #tpu.core_type<tc>, window_params = [{transform_indices = @transform_0, window_bounds = array<i64: 8, 768>}, {pipeline_mode = #tpu.pipeline_mode<synchronous>, transform_indices = @transform_1, window_bounds = array<i64: 768, 128>}, {pipeline_mode = #tpu.pipeline_mode<synchronous>, transform_indices = @transform_2, window_bounds = array<i64: 1, 128>}, {pipeline_mode = #tpu.pipeline_mode<synchronous>, transform_indices = @transform_3, window_bounds = array<i64: 128, 64>}, {pipeline_mode = #tpu.pipeline_mode<synchronous>, transform_indices = @transform_4, window_bounds = array<i64: 1, 64>}, {pipeline_mode = #tpu.pipeline_mode<synchronous>, transform_indices = @transform_5, window_bounds = array<i64: 64, 32>}, {pipeline_mode = #tpu.pipeline_mode<synchronous>, transform_indices = @transform_6, window_bounds = array<i64: 1, 32>}, {pipeline_mode = #tpu.pipeline_mode<synchronous>, transform_indices = @transform_7, window_bounds = array<i64: 32, 128>}, {pipeline_mode = #tpu.pipeline_mode<synchronous>, transform_indices = @transform_8, window_bounds = array<i64: 1, 128>}, {transform_indices = @transform_9, window_bounds = array<i64: 8, 128>}]} {
    %c0 = arith.constant 0 : index
    %c0_0 = arith.constant 0 : index
    %0 = vector.load %arg1[%c0, %c0_0] : memref<8x768xbf16, #tpu.memory_space<vmem>>, vector<8x768xbf16>
    %c0_1 = arith.constant 0 : index
    %c0_2 = arith.constant 0 : index
    %1 = vector.load %arg2[%c0_1, %c0_2] : memref<768x128xbf16, #tpu.memory_space<vmem>>, vector<768x128xbf16>
    %cst = arith.constant dense<0.000000e+00> : vector<8x128xf32>
    %2 = tpu.matmul %0, %1, %cst {dimension_numbers = #tpu.dot_dimension_numbers<[1], [0], [0], [1], [0, 0, 1, 1], [], []>} : vector<8x768xbf16>, vector<768x128xbf16>, vector<8x128xf32> -> vector<8x128xf32>
    %c0_3 = arith.constant 0 : index
    %c0_4 = arith.constant 0 : index
    %3 = vector.load %arg3[%c0_3, %c0_4] : memref<1x128xf32, #tpu.memory_space<vmem>>, vector<1x128xf32>
    %4 = vector.broadcast %3 : vector<1x128xf32> to vector<8x128xf32>
    %5 = arith.addf %2, %4 : vector<8x128xf32>
    %cst_5 = arith.constant 0.000000e+00 : f32
    %6 = vector.broadcast %cst_5 : f32 to vector<8x128xf32>
    %7 = arith.maximumf %5, %6 : vector<8x128xf32>
    %8 = arith.truncf %7 : vector<8x128xf32> to vector<8x128xbf16>
    %c0_6 = arith.constant 0 : index
    %c0_7 = arith.constant 0 : index
    %9 = vector.load %arg4[%c0_6, %c0_7] : memref<128x64xbf16, #tpu.memory_space<vmem>>, vector<128x64xbf16>
    %cst_8 = arith.constant dense<0.000000e+00> : vector<8x64xf32>
    %10 = tpu.matmul %8, %9, %cst_8 {dimension_numbers = #tpu.dot_dimension_numbers<[1], [0], [0], [1], [0, 0, 1, 1], [], []>} : vector<8x128xbf16>, vector<128x64xbf16>, vector<8x64xf32> -> vector<8x64xf32>
    %c0_9 = arith.constant 0 : index
    %c0_10 = arith.constant 0 : index
    %11 = vector.load %arg5[%c0_9, %c0_10] : memref<1x64xf32, #tpu.memory_space<vmem>>, vector<1x64xf32>
    %12 = vector.broadcast %11 : vector<1x64xf32> to vector<8x64xf32>
    %13 = arith.addf %10, %12 : vector<8x64xf32>
    %cst_11 = arith.constant 0.000000e+00 : f32
    %14 = vector.broadcast %cst_11 : f32 to vector<8x64xf32>
    %15 = arith.maximumf %13, %14 : vector<8x64xf32>
    %16 = arith.truncf %15 : vector<8x64xf32> to vector<8x64xbf16>
    %c0_12 = arith.constant 0 : index
    %c0_13 = arith.constant 0 : index
    %17 = vector.load %arg6[%c0_12, %c0_13] : memref<64x32xbf16, #tpu.memory_space<vmem>>, vector<64x32xbf16>
    %cst_14 = arith.constant dense<0.000000e+00> : vector<8x32xf32>
    %18 = tpu.matmul %16, %17, %cst_14 {dimension_numbers = #tpu.dot_dimension_numbers<[1], [0], [0], [1], [0, 0, 1, 1], [], []>} : vector<8x64xbf16>, vector<64x32xbf16>, vector<8x32xf32> -> vector<8x32xf32>
    %c0_15 = arith.constant 0 : index
    %c0_16 = arith.constant 0 : index
    %19 = vector.load %arg7[%c0_15, %c0_16] : memref<1x32xf32, #tpu.memory_space<vmem>>, vector<1x32xf32>
    %20 = vector.broadcast %19 : vector<1x32xf32> to vector<8x32xf32>
    %21 = arith.addf %18, %20 : vector<8x32xf32>
    %cst_17 = arith.constant 0.000000e+00 : f32
    %22 = vector.broadcast %cst_17 : f32 to vector<8x32xf32>
    %23 = arith.maximumf %21, %22 : vector<8x32xf32>
    %24 = arith.truncf %23 : vector<8x32xf32> to vector<8x32xbf16>
    %c0_18 = arith.constant 0 : index
    %c0_19 = arith.constant 0 : index
    %25 = vector.load %arg8[%c0_18, %c0_19] : memref<32x128xbf16, #tpu.memory_space<vmem>>, vector<32x128xbf16>
    %cst_20 = arith.constant dense<0.000000e+00> : vector<8x128xf32>
    %26 = tpu.matmul %24, %25, %cst_20 {dimension_numbers = #tpu.dot_dimension_numbers<[1], [0], [0], [1], [0, 0, 1, 1], [], []>} : vector<8x32xbf16>, vector<32x128xbf16>, vector<8x128xf32> -> vector<8x128xf32>
    %c0_21 = arith.constant 0 : index
    %c0_22 = arith.constant 0 : index
    %27 = vector.load %arg9[%c0_21, %c0_22] : memref<1x128xf32, #tpu.memory_space<vmem>>, vector<1x128xf32>
    %28 = vector.broadcast %27 : vector<1x128xf32> to vector<8x128xf32>
    %29 = arith.addf %26, %28 : vector<8x128xf32>
    %cst_23 = arith.constant dense<0xFF800000> : vector<8xf32>
    %30 = vector.multi_reduction <maximumf>, %29, %cst_23 [1] : vector<8x128xf32> to vector<8xf32>
    %31 = vector.shape_cast %30 : vector<8xf32> to vector<8x1xf32>
    %32 = vector.broadcast %31 : vector<8x1xf32> to vector<8x128xf32>
    %33 = arith.subf %29, %32 : vector<8x128xf32>
    %34 = math.exp %33 : vector<8x128xf32>
    %cst_24 = arith.constant dense<0.000000e+00> : vector<8xf32>
    %35 = vector.multi_reduction <add>, %34, %cst_24 [1] : vector<8x128xf32> to vector<8xf32>
    %36 = vector.shape_cast %35 : vector<8xf32> to vector<8x1xf32>
    %37 = math.log %36 : vector<8x1xf32>
    %38 = vector.broadcast %37 : vector<8x1xf32> to vector<8x128xf32>
    %39 = arith.subf %33, %38 : vector<8x128xf32>
    %c0_25 = arith.constant 0 : index
    %c0_26 = arith.constant 0 : index
    %40 = vector.load %arg10[%c0_25, %c0_26] : memref<8x128xf32, #tpu.memory_space<vmem>>, vector<8x128xf32>
    tpu.vector_store %arg10[%c0_25, %c0_26], %39 {strides = array<i32>} : memref<8x128xf32, #tpu.memory_space<vmem>>, vector<8x128xf32>,
    return
  }
  func.func @transform_0(%arg0: i32) -> (i32, i32) {
    %c0_i32 = arith.constant 0 : i32
    %c0_i32_0 = arith.constant 0 : i32
    return %arg0, %c0_i32 : i32, i32
  }
  func.func @transform_1(%arg0: i32) -> (i32, i32) {
    %c0_i32 = arith.constant 0 : i32
    %c0_i32_0 = arith.constant 0 : i32
    %c0_i32_1 = arith.constant 0 : i32
    return %c0_i32, %c0_i32_0 : i32, i32
  }
  func.func @transform_2(%arg0: i32) -> (i32, i32) {
    %c0_i32 = arith.constant 0 : i32
    %c0_i32_0 = arith.constant 0 : i32
    %c0_i32_1 = arith.constant 0 : i32
    return %c0_i32, %c0_i32_0 : i32, i32
  }
  func.func @transform_3(%arg0: i32) -> (i32, i32) {
    %c0_i32 = arith.constant 0 : i32
    %c0_i32_0 = arith.constant 0 : i32
    %c0_i32_1 = arith.constant 0 : i32
    return %c0_i32, %c0_i32_0 : i32, i32
  }
  func.func @transform_4(%arg0: i32) -> (i32, i32) {
    %c0_i32 = arith.constant 0 : i32
    %c0_i32_0 = arith.constant 0 : i32
    %c0_i32_1 = arith.constant 0 : i32
    return %c0_i32, %c0_i32_0 : i32, i32
  }
  func.func @transform_5(%arg0: i32) -> (i32, i32) {
    %c0_i32 = arith.constant 0 : i32
    %c0_i32_0 = arith.constant 0 : i32
    %c0_i32_1 = arith.constant 0 : i32
    return %c0_i32, %c0_i32_0 : i32, i32
  }
  func.func @transform_6(%arg0: i32) -> (i32, i32) {
    %c0_i32 = arith.constant 0 : i32
    %c0_i32_0 = arith.constant 0 : i32
    %c0_i32_1 = arith.constant 0 : i32
    return %c0_i32, %c0_i32_0 : i32, i32
  }
  func.func @transform_7(%arg0: i32) -> (i32, i32) {
    %c0_i32 = arith.constant 0 : i32
    %c0_i32_0 = arith.constant 0 : i32
    %c0_i32_1 = arith.constant 0 : i32
    return %c0_i32, %c0_i32_0 : i32, i32
  }
  func.func @transform_8(%arg0: i32) -> (i32, i32) {
    %c0_i32 = arith.constant 0 : i32
    %c0_i32_0 = arith.constant 0 : i32
    %c0_i32_1 = arith.constant 0 : i32
    return %c0_i32, %c0_i32_0 : i32, i32
  }
  func.func @transform_9(%arg0: i32) -> (i32, i32) {
    %c0_i32 = arith.constant 0 : i32
    %c0_i32_0 = arith.constant 0 : i32
    return %arg0, %c0_i32 : i32, i32
  }
}

</mosaic_0001>

<llo_original>
// kernel: net_forward.1
$region0: #{net_forward.1}
  #allocation0 [shape = 'u32[]', space=smem, size = 0x4, offset = 0x4, fixed_abs, tag = 'smem constant byte address 0x4 - core index']
  #allocation1 [shape = 'u32[144,128]{1,0:T(1,128)}', space=vmem, size = 0x12000, scoped, tag = 'internal scratch']
  %s0 = inlined_call_operand.vmem [shape: bf16[8,768], index: 0, kind: input, shape index: {}]
  %s1 = inlined_call_operand.vmem [shape: bf16[768,128], index: 1, kind: input, shape index: {}]
  %s2 = inlined_call_operand.vmem [shape: f32[1,128], index: 2, kind: input, shape index: {}]
  %s3 = inlined_call_operand.vmem [shape: bf16[128,64], index: 3, kind: input, shape index: {}]
  %s4 = inlined_call_operand.vmem [shape: f32[1,64], index: 4, kind: input, shape index: {}]
  %s5 = inlined_call_operand.vmem [shape: bf16[64,32], index: 5, kind: input, shape index: {}]
  %s6 = inlined_call_operand.vmem [shape: f32[1,32], index: 6, kind: input, shape index: {}]
  %s7 = inlined_call_operand.vmem [shape: bf16[32,128], index: 7, kind: input, shape index: {}]
  %s8 = inlined_call_operand.hbm [shape: f32[1,128], index: 8, kind: input, shape index: {}]
  %s9 = inlined_call_operand.vmem [shape: f32[8,128], index: 9, kind: output, shape index: {}]
  %s10 = sld [smem:[#allocation0]]
  $region50: #{net_forward.1} parent=0
    _
  %s12 = ssub.s32 1, %s10
  %s13 = scalar_select 0, %s12, %s10
  $region1: #{net_forward.1} parent=0
    #allocation2 [shape = 'u8[512]{0}', space=vmem, size = 0x400, scoped, tag = 'input window, operand 8, single buffered']
    #allocation3 [shape = 's32[1]{0}', space=sflag, size = 0x4, scoped, tag = 'scoped memory for net_forward.1']
    %14 = vsyncpa [#allocation3], 0
    // Predicated region
    $region2: #{net_forward.1} parent=1 // pred_check
      _
    $region3: #{net_forward.1} parent=1 // pred_check_branch
      %16 = sbr.rel (0) target = $region5
    $region4: #{net_forward.1} parent=1 // pred_region
      _
    $region5: #{net_forward.1} parent=1 // pred_fallthru
      _
    // Predicated region
    $region6: #{net_forward.1} parent=1 // pred_check
      _
    $region7: #{net_forward.1} parent=1 // pred_check_branch
      %18 = sbr.rel (0) target = $region9
    $region8: #{net_forward.1} parent=1 // pred_region
      _
    $region9: #{net_forward.1} parent=1 // pred_fallthru
      _
    // Predicated region
    $region10: #{net_forward.1} parent=1 // pred_check
      _
    $region11: #{net_forward.1} parent=1 // pred_check_branch
      %20 = sbr.rel (0) target = $region13
    $region12: #{net_forward.1} parent=1 // pred_region
      _
    $region13: #{net_forward.1} parent=1 // pred_fallthru
      _
    // Predicated region
    $region14: #{net_forward.1} parent=1 // pred_check
      _
    $region15: #{net_forward.1} parent=1 // pred_check_branch
      %22 = sbr.rel (0) target = $region17
    $region16: #{net_forward.1} parent=1 // pred_region
      _
    $region17: #{net_forward.1} parent=1 // pred_fallthru
      _
    // Predicated region
    $region18: #{net_forward.1} parent=1 // pred_check
      _
    $region19: #{net_forward.1} parent=1 // pred_check_branch
      %24 = sbr.rel (0) target = $region21
    $region20: #{net_forward.1} parent=1 // pred_region
      _
    $region21: #{net_forward.1} parent=1 // pred_fallthru
      _
    // Predicated region
    $region22: #{net_forward.1} parent=1 // pred_check
      _
    $region23: #{net_forward.1} parent=1 // pred_check_branch
      %26 = sbr.rel (0) target = $region25
    $region24: #{net_forward.1} parent=1 // pred_region
      _
    $region25: #{net_forward.1} parent=1 // pred_fallthru
      _
    // Predicated region
    $region26: #{net_forward.1} parent=1 // pred_check
      _
    $region27: #{net_forward.1} parent=1 // pred_check_branch
      %28 = sbr.rel (0) target = $region29
    $region28: #{net_forward.1} parent=1 // pred_region
      _
    $region29: #{net_forward.1} parent=1 // pred_fallthru
      _
    // Predicated region
    $region30: #{net_forward.1} parent=1 // pred_check
      _
    $region31: #{net_forward.1} parent=1 // pred_check_branch
      %30 = sbr.rel (0) target = $region33
    $region32: #{net_forward.1} parent=1 // pred_region
      _
    $region33: #{net_forward.1} parent=1 // pred_fallthru
      _
    // Predicated region
    $region34: #{net_forward.1} parent=1 // pred_check
      _
    $region35: #{net_forward.1} parent=1 // pred_check_branch
      %32 = sbr.rel (0) target = $region37
    $region36: #{net_forward.1} parent=1 // pred_region
      %s34 = ssub.s32 16, 16
      %35 = vsyncadd [#allocation3], %s34
      %s37 = sshll.u32 [#allocation2], 4
      %s38 = int_to_ptr.vmem [resolvable:$true] %s37
      %40 = dma.hbm_to_vmem [thread:$0]  %s8, 16, %s38, [#allocation3]
    $region37: #{net_forward.1} parent=1 // pred_fallthru
      _
    // Predicated region
    $region38: #{net_forward.1} parent=1 // pred_check
      _
    $region39: #{net_forward.1} parent=1 // pred_check_branch
      %42 = sbr.rel (0) target = $region41
    $region40: #{net_forward.1} parent=1 // pred_region
      %43 = dma.done [#allocation3], 16
    $region41: #{net_forward.1} parent=1 // pred_fallthru
      _
    %v45 = vld [vmem:[%s0] sm:$0xff]
    %v46 = vld [vmem:[%s0 + $0x8] sm:$0xff]
    %v47 = vld [vmem:[%s0 + $0x10] sm:$0xff]
    %v48 = vld [vmem:[%s1] sm:$0xf]
    %v49 = vld [vmem:[%s1 + $0x4] sm:$0xf]
    %v50 = vld [vmem:[%s1 + $0x8] sm:$0xf]
    %v51 = vld [vmem:[%s1 + $0xc] sm:$0xf]
    %v52 = vld [vmem:[%s1 + $0x10] sm:$0xf]
    %v53 = vld [vmem:[%s1 + $0x14] sm:$0xf]
    %v54 = vld [vmem:[%s1 + $0x18] sm:$0xf]
    %v55 = vld [vmem:[%s1 + $0x1c] sm:$0xf]
    %v56 = vld [vmem:[%s1 + $0x20] sm:$0xf]
    %v57 = vld [vmem:[%s1 + $0x24] sm:$0xf]
    %v58 = vld [vmem:[%s1 + $0x28] sm:$0xf]
    %v59 = vld [vmem:[%s1 + $0x2c] sm:$0xf]
    %v60 = vld [vmem:[%s1 + $0x30] sm:$0xf]
    %v61 = vld [vmem:[%s1 + $0x34] sm:$0xf]
    %v62 = vld [vmem:[%s1 + $0x38] sm:$0xf]
    %v63 = vld [vmem:[%s1 + $0x3c] sm:$0xf]
    %v64 = vld [vmem:[%s1 + $0x40] sm:$0xf]
    %v65 = vld [vmem:[%s1 + $0x44] sm:$0xf]
    %v66 = vld [vmem:[%s1 + $0x48] sm:$0xf]
    %v67 = vld [vmem:[%s1 + $0x4c] sm:$0xf]
    %v68 = vld [vmem:[%s1 + $0x50] sm:$0xf]
    %v69 = vld [vmem:[%s1 + $0x54] sm:$0xf]
    %v70 = vld [vmem:[%s1 + $0x58] sm:$0xf]
    %v71 = vld [vmem:[%s1 + $0x5c] sm:$0xf]
    %v72 = vld [vmem:[%s1 + $0x60] sm:$0xf]
    %v73 = vld [vmem:[%s1 + $0x64] sm:$0xf]
    %v74 = vld [vmem:[%s1 + $0x68] sm:$0xf]
    %v75 = vld [vmem:[%s1 + $0x6c] sm:$0xf]
    %v76 = vld [vmem:[%s1 + $0x70] sm:$0xf]
    %v77 = vld [vmem:[%s1 + $0x74] sm:$0xf]
    %v78 = vld [vmem:[%s1 + $0x78] sm:$0xf]
    %v79 = vld [vmem:[%s1 + $0x7c] sm:$0xf]
    %v80 = vld [vmem:[%s1 + $0x80] sm:$0xf]
    %v81 = vld [vmem:[%s1 + $0x84] sm:$0xf]
    %v82 = vld [vmem:[%s1 + $0x88] sm:$0xf]
    %v83 = vld [vmem:[%s1 + $0x8c] sm:$0xf]
    %v84 = vld [vmem:[%s1 + $0x90] sm:$0xf]
    %v85 = vld [vmem:[%s1 + $0x94] sm:$0xf]
    %v86 = vld [vmem:[%s1 + $0x98] sm:$0xf]
    %v87 = vld [vmem:[%s1 + $0x9c] sm:$0xf]
    %v88 = vld [vmem:[%s1 + $0xa0] sm:$0xf]
    %v89 = vld [vmem:[%s1 + $0xa4] sm:$0xf]
    %v90 = vld [vmem:[%s1 + $0xa8] sm:$0xf]
    %v91 = vld [vmem:[%s1 + $0xac] sm:$0xf]
    %v92 = vld [vmem:[%s1 + $0xb0] sm:$0xf]
    %v93 = vld [vmem:[%s1 + $0xb4] sm:$0xf]
    %v94 = vld [vmem:[%s1 + $0xb8] sm:$0xf]
    %v95 = vld [vmem:[%s1 + $0xbc] sm:$0xf]
    %v96 = vld [vmem:[%s1 + $0xc0] sm:$0xf]
    %v97 = vld [vmem:[%s1 + $0xc4] sm:$0xf]
    %v98 = vld [vmem:[%s1 + $0xc8] sm:$0xf]
    %v99 = vld [vmem:[%s1 + $0xcc] sm:$0xf]
    %v100 = vld [vmem:[%s1 + $0xd0] sm:$0xf]
    %v101 = vld [vmem:[%s1 + $0xd4] sm:$0xf]
    %v102 = vld [vmem:[%s1 + $0xd8] sm:$0xf]
    %v103 = vld [vmem:[%s1 + $0xdc] sm:$0xf]
    %v104 = vld [vmem:[%s1 + $0xe0] sm:$0xf]
    %v105 = vld [vmem:[%s1 + $0xe4] sm:$0xf]
    %v106 = vld [vmem:[%s1 + $0xe8] sm:$0xf]
    %v107 = vld [vmem:[%s1 + $0xec] sm:$0xf]
    %v108 = vld [vmem:[%s1 + $0xf0] sm:$0xf]
    %v109 = vld [vmem:[%s1 + $0xf4] sm:$0xf]
    %v110 = vld [vmem:[%s1 + $0xf8] sm:$0xf]
    %v111 = vld [vmem:[%s1 + $0xfc] sm:$0xf]
    %v112 = vld [vmem:[%s1 + $0x100] sm:$0xf]
    %v113 = vld [vmem:[%s1 + $0x104] sm:$0xf]
    %v114 = vld [vmem:[%s1 + $0x108] sm:$0xf]
    %v115 = vld [vmem:[%s1 + $0x10c] sm:$0xf]
    %v116 = vld [vmem:[%s1 + $0x110] sm:$0xf]
    %v117 = vld [vmem:[%s1 + $0x114] sm:$0xf]
    %v118 = vld [vmem:[%s1 + $0x118] sm:$0xf]
    %v119 = vld [vmem:[%s1 + $0x11c] sm:$0xf]
    %v120 = vld [vmem:[%s1 + $0x120] sm:$0xf]
    %v121 = vld [vmem:[%s1 + $0x124] sm:$0xf]
    %v122 = vld [vmem:[%s1 + $0x128] sm:$0xf]
    %v123 = vld [vmem:[%s1 + $0x12c] sm:$0xf]
    %v124 = vld [vmem:[%s1 + $0x130] sm:$0xf]
    %v125 = vld [vmem:[%s1 + $0x134] sm:$0xf]
    %v126 = vld [vmem:[%s1 + $0x138] sm:$0xf]
    %v127 = vld [vmem:[%s1 + $0x13c] sm:$0xf]
    %v128 = vld [vmem:[%s1 + $0x140] sm:$0xf]
    %v129 = vld [vmem:[%s1 + $0x144] sm:$0xf]
    %v130 = vld [vmem:[%s1 + $0x148] sm:$0xf]
    %v131 = vld [vmem:[%s1 + $0x14c] sm:$0xf]
    %v132 = vld [vmem:[%s1 + $0x150] sm:$0xf]
    %v133 = vld [vmem:[%s1 + $0x154] sm:$0xf]
    %v134 = vld [vmem:[%s1 + $0x158] sm:$0xf]
    %v135 = vld [vmem:[%s1 + $0x15c] sm:$0xf]
    %v136 = vld [vmem:[%s1 + $0x160] sm:$0xf]
    %v137 = vld [vmem:[%s1 + $0x164] sm:$0xf]
    %v138 = vld [vmem:[%s1 + $0x168] sm:$0xf]
    %v139 = vld [vmem:[%s1 + $0x16c] sm:$0xf]
    %v140 = vld [vmem:[%s1 + $0x170] sm:$0xf]
    %v141 = vld [vmem:[%s1 + $0x174] sm:$0xf]
    %v142 = vld [vmem:[%s1 + $0x178] sm:$0xf]
    %v143 = vld [vmem:[%s1 + $0x17c] sm:$0xf]
    %v144 = vld [vmem:[%s2] sm:$0x1]
    %v146 = vlaneseq
    %v147 = vshrl.u32 %v146, 7
    %v148 = vsub.s32 0, %v147
    %v149 = vrot.slane %v144, %v148
    %v154 = vunpack.c.l.b16 %v45
    %v155 = vunpack.c.h.b16 %v45
    %v156 = vunpack.c.l.b16 %v46
    %v157 = vunpack.c.h.b16 %v46
    %v158 = vunpack.c.l.b16 %v47
    %v159 = vunpack.c.h.b16 %v47
    %v160 = vpack.c.b16 %v154, %v154
    %v161 = vpack.c.b16 %v155, %v155
    %v162 = vpack.c.b16 %v156, %v156
    %v163 = vpack.c.b16 %v157, %v157
    %v164 = vpack.c.b16 %v158, %v158
    %v165 = vpack.c.b16 %v159, %v159
    %v268 = vunpack.c.l.b16 %v48
    %v269 = vunpack.c.l.b16 %v49
    %v270 = vunpack.c.l.b16 %v50
    %v271 = vunpack.c.l.b16 %v51
    %v272 = vunpack.c.l.b16 %v52
    %v273 = vunpack.c.l.b16 %v53
    %v274 = vunpack.c.l.b16 %v54
    %v275 = vunpack.c.l.b16 %v55
    %v276 = vunpack.c.l.b16 %v56
    %v277 = vunpack.c.l.b16 %v57
    %v278 = vunpack.c.l.b16 %v58
    %v279 = vunpack.c.l.b16 %v59
    %v280 = vunpack.c.l.b16 %v60
    %v281 = vunpack.c.l.b16 %v61
    %v282 = vunpack.c.l.b16 %v62
    %v283 = vunpack.c.l.b16 %v63
    %v284 = vunpack.c.l.b16 %v64
    %v285 = vunpack.c.l.b16 %v65
    %v286 = vunpack.c.l.b16 %v66
    %v287 = vunpack.c.l.b16 %v67
    %v288 = vunpack.c.l.b16 %v68
    %v289 = vunpack.c.l.b16 %v69
    %v290 = vunpack.c.l.b16 %v70
    %v291 = vunpack.c.l.b16 %v71
    %v292 = vunpack.c.l.b16 %v72
    %v293 = vunpack.c.l.b16 %v73
    %v294 = vunpack.c.l.b16 %v74
    %v295 = vunpack.c.l.b16 %v75
    %v296 = vunpack.c.l.b16 %v76
    %v297 = vunpack.c.l.b16 %v77
    %v298 = vunpack.c.l.b16 %v78
    %v299 = vunpack.c.l.b16 %v79
    %v300 = vunpack.c.l.b16 %v80
    %v301 = vunpack.c.l.b16 %v81
    %v302 = vunpack.c.l.b16 %v82
    %v303 = vunpack.c.l.b16 %v83
    %v304 = vunpack.c.l.b16 %v84
    %v305 = vunpack.c.l.b16 %v85
    %v306 = vunpack.c.l.b16 %v86
    %v307 = vunpack.c.l.b16 %v87
    %v308 = vunpack.c.l.b16 %v88
    %v309 = vunpack.c.l.b16 %v89
    %v310 = vunpack.c.l.b16 %v90
    %v311 = vunpack.c.l.b16 %v91
    %v312 = vunpack.c.l.b16 %v92
    %v313 = vunpack.c.l.b16 %v93
    %v314 = vunpack.c.l.b16 %v94
    %v315 = vunpack.c.l.b16 %v95
    %v316 = vunpack.c.l.b16 %v96
    %v317 = vunpack.c.l.b16 %v97
    %v318 = vunpack.c.l.b16 %v98
    %v319 = vunpack.c.l.b16 %v99
    %v320 = vunpack.c.l.b16 %v100
    %v321 = vunpack.c.l.b16 %v101
    %v322 = vunpack.c.l.b16 %v102
    %v323 = vunpack.c.l.b16 %v103
    %v324 = vunpack.c.l.b16 %v104
    %v325 = vunpack.c.l.b16 %v105
    %v326 = vunpack.c.l.b16 %v106
    %v327 = vunpack.c.l.b16 %v107
    %v328 = vunpack.c.l.b16 %v108
    %v329 = vunpack.c.l.b16 %v109
    %v330 = vunpack.c.l.b16 %v110
    %v331 = vunpack.c.l.b16 %v111
    %v332 = vunpack.c.l.b16 %v112
    %v333 = vunpack.c.l.b16 %v113
    %v334 = vunpack.c.l.b16 %v114
    %v335 = vunpack.c.l.b16 %v115
    %v336 = vunpack.c.l.b16 %v116
    %v337 = vunpack.c.l.b16 %v117
    %v338 = vunpack.c.l.b16 %v118
    %v339 = vunpack.c.l.b16 %v119
    %v340 = vunpack.c.l.b16 %v120
    %v341 = vunpack.c.l.b16 %v121
    %v342 = vunpack.c.l.b16 %v122
    %v343 = vunpack.c.l.b16 %v123
    %v344 = vunpack.c.l.b16 %v124
    %v345 = vunpack.c.l.b16 %v125
    %v346 = vunpack.c.l.b16 %v126
    %v347 = vunpack.c.l.b16 %v127
    %v348 = vunpack.c.l.b16 %v128
    %v349 = vunpack.c.l.b16 %v129
    %v350 = vunpack.c.l.b16 %v130
    %v351 = vunpack.c.l.b16 %v131
    %v352 = vunpack.c.l.b16 %v132
    %v353 = vunpack.c.l.b16 %v133
    %v354 = vunpack.c.l.b16 %v134
    %v355 = vunpack.c.l.b16 %v135
    %v356 = vunpack.c.l.b16 %v136
    %v357 = vunpack.c.l.b16 %v137
    %v358 = vunpack.c.l.b16 %v138
    %v359 = vunpack.c.l.b16 %v139
    %v360 = vunpack.c.l.b16 %v140
    %v361 = vunpack.c.l.b16 %v141
    %v362 = vunpack.c.l.b16 %v142
    %v363 = vunpack.c.l.b16 %v143
    %v364 = vpack.c.b16 %v269, %v268
    %v365 = vpack.c.b16 %v271, %v270
    %v366 = vpack.c.b16 %v273, %v272
    %v367 = vpack.c.b16 %v275, %v274
    %v368 = vpack.c.b16 %v277, %v276
    %v369 = vpack.c.b16 %v279, %v278
    %v370 = vpack.c.b16 %v281, %v280
    %v371 = vpack.c.b16 %v283, %v282
    %v372 = vpack.c.b16 %v285, %v284
    %v373 = vpack.c.b16 %v287, %v286
    %v374 = vpack.c.b16 %v289, %v288
    %v375 = vpack.c.b16 %v291, %v290
    %v376 = vpack.c.b16 %v293, %v292
    %v377 = vpack.c.b16 %v295, %v294
    %v378 = vpack.c.b16 %v297, %v296
    %v379 = vpack.c.b16 %v299, %v298
    %v380 = vpack.c.b16 %v301, %v300
    %v381 = vpack.c.b16 %v303, %v302
    %v382 = vpack.c.b16 %v305, %v304
    %v383 = vpack.c.b16 %v307, %v306
    %v384 = vpack.c.b16 %v309, %v308
    %v385 = vpack.c.b16 %v311, %v310
    %v386 = vpack.c.b16 %v313, %v312
    %v387 = vpack.c.b16 %v315, %v314
    %v388 = vpack.c.b16 %v317, %v316
    %v389 = vpack.c.b16 %v319, %v318
    %v390 = vpack.c.b16 %v321, %v320
    %v391 = vpack.c.b16 %v323, %v322
    %v392 = vpack.c.b16 %v325, %v324
    %v393 = vpack.c.b16 %v327, %v326
    %v394 = vpack.c.b16 %v329, %v328
    %v395 = vpack.c.b16 %v331, %v330
    %v396 = vpack.c.b16 %v333, %v332
    %v397 = vpack.c.b16 %v335, %v334
    %v398 = vpack.c.b16 %v337, %v336
    %v399 = vpack.c.b16 %v339, %v338
    %v400 = vpack.c.b16 %v341, %v340
    %v401 = vpack.c.b16 %v343, %v342
    %v402 = vpack.c.b16 %v345, %v344
    %v403 = vpack.c.b16 %v347, %v346
    %v404 = vpack.c.b16 %v349, %v348
    %v405 = vpack.c.b16 %v351, %v350
    %v406 = vpack.c.b16 %v353, %v352
    %v407 = vpack.c.b16 %v355, %v354
    %v408 = vpack.c.b16 %v357, %v356
    %v409 = vpack.c.b16 %v359, %v358
    %v410 = vpack.c.b16 %v361, %v360
    %v411 = vpack.c.b16 %v363, %v362
    %460 = vmatprep.subr.bf16.mxu0 0
    %461 = vmatpush1.bf16.msra.mxu0 %v364
    %462 = vmatprep.subr.bf16.mxu0 0
    %463 = vmatpush1.bf16.msra.mxu0 %v365
    %464 = vmatprep.subr.bf16.mxu0 0
    %465 = vmatpush1.bf16.msra.mxu0 %v366
    %466 = vmatprep.subr.bf16.mxu0 0
    %467 = vmatpush1.bf16.msra.mxu0 %v367
    %468 = vmatprep.subr.bf16.mxu0 0
    %469 = vmatpush1.bf16.msra.mxu0 %v368
    %470 = vmatprep.subr.bf16.mxu0 0
    %471 = vmatpush1.bf16.msra.mxu0 %v369
    %472 = vmatprep.subr.bf16.mxu0 0
    %473 = vmatpush1.bf16.msra.mxu0 %v370
    %474 = vmatprep.subr.bf16.mxu0 0
    %475 = vmatpush1.bf16.msra.mxu0 %v371
    %476 = vmatprep.subr.bf16.mxu0 0
    %477 = vmatpush1.bf16.msra.mxu0 %v372
    %478 = vmatprep.subr.bf16.mxu0 0
    %479 = vmatpush1.bf16.msra.mxu0 %v373
    %480 = vmatprep.subr.bf16.mxu0 0
    %481 = vmatpush1.bf16.msra.mxu0 %v374
    %482 = vmatprep.subr.bf16.mxu0 0
    %483 = vmatpush1.bf16.msra.mxu0 %v375
    %484 = vmatprep.subr.bf16.mxu0 0
    %485 = vmatpush1.bf16.msra.mxu0 %v376
    %486 = vmatprep.subr.bf16.mxu0 0
    %487 = vmatpush1.bf16.msra.mxu0 %v377
    %488 = vmatprep.subr.bf16.mxu0 0
    %489 = vmatpush1.bf16.msra.mxu0 %v378
    %490 = vmatprep.subr.bf16.mxu0 0
    %491 = vmatpush1.bf16.msra.mxu0 %v379
    %492 = vmatprep.mubr.bf16.mxu0 %v161
    %493 = vmatmul.mubr.bf16.gmra.mrb[0].mxu0 %v160
    %v494 = vpop.f32.mrb[0].mxu0
    %v495 = vadd.f32 %v149, %v494
    %v496 = vpop.f32.mrb[0].mxu0
    %v497 = vpop.f32.mrb[0].mxu0
    %v498 = vpop.f32.mrb[0].mxu0
    %499 = vdwg.mxu0
    %500 = vmatprep.subr.bf16.mxu0 0
    %501 = vmatpush1.bf16.msra.mxu0 %v380
    %502 = vmatprep.subr.bf16.mxu0 0
    %503 = vmatpush1.bf16.msra.mxu0 %v381
    %504 = vmatprep.subr.bf16.mxu0 0
    %505 = vmatpush1.bf16.msra.mxu0 %v382
    %506 = vmatprep.subr.bf16.mxu0 0
    %507 = vmatpush1.bf16.msra.mxu0 %v383
    %508 = vmatprep.subr.bf16.mxu0 0
    %509 = vmatpush1.bf16.msra.mxu0 %v384
    %510 = vmatprep.subr.bf16.mxu0 0
    %511 = vmatpush1.bf16.msra.mxu0 %v385
    %512 = vmatprep.subr.bf16.mxu0 0
    %513 = vmatpush1.bf16.msra.mxu0 %v386
    %514 = vmatprep.subr.bf16.mxu0 0
    %515 = vmatpush1.bf16.msra.mxu0 %v387
    %516 = vmatprep.subr.bf16.mxu0 0
    %517 = vmatpush1.bf16.msra.mxu0 %v388
    %518 = vmatprep.subr.bf16.mxu0 0
    %519 = vmatpush1.bf16.msra.mxu0 %v389
    %520 = vmatprep.subr.bf16.mxu0 0
    %521 = vmatpush1.bf16.msra.mxu0 %v390
    %522 = vmatprep.subr.bf16.mxu0 0
    %523 = vmatpush1.bf16.msra.mxu0 %v391
    %524 = vmatprep.subr.bf16.mxu0 0
    %525 = vmatpush1.bf16.msra.mxu0 %v392
    %526 = vmatprep.subr.bf16.mxu0 0
    %527 = vmatpush1.bf16.msra.mxu0 %v393
    %528 = vmatprep.subr.bf16.mxu0 0
    %529 = vmatpush1.bf16.msra.mxu0 %v394
    %530 = vmatprep.subr.bf16.mxu0 0
    %531 = vmatpush1.bf16.msra.mxu0 %v395
    %532 = vmatprep.mubr.bf16.mxu0 %v163
    %533 = vmatmul.mubr.bf16.gmra.mrb[0].mxu0 %v162
    %v534 = vpop.f32.mrb[0].mxu0
    %v535 = vadd.f32 %v495, %v534
    %v536 = vpop.f32.mrb[0].mxu0
    %v537 = vpop.f32.mrb[0].mxu0
    %v538 = vpop.f32.mrb[0].mxu0
    %539 = vdwg.mxu0
    %540 = vmatprep.subr.bf16.mxu0 0
    %541 = vmatpush1.bf16.msra.mxu0 %v396
    %542 = vmatprep.subr.bf16.mxu0 0
    %543 = vmatpush1.bf16.msra.mxu0 %v397
    %544 = vmatprep.subr.bf16.mxu0 0
    %545 = vmatpush1.bf16.msra.mxu0 %v398
    %546 = vmatprep.subr.bf16.mxu0 0
    %547 = vmatpush1.bf16.msra.mxu0 %v399
    %548 = vmatprep.subr.bf16.mxu0 0
    %549 = vmatpush1.bf16.msra.mxu0 %v400
    %550 = vmatprep.subr.bf16.mxu0 0
    %551 = vmatpush1.bf16.msra.mxu0 %v401
    %552 = vmatprep.subr.bf16.mxu0 0
    %553 = vmatpush1.bf16.msra.mxu0 %v402
    %554 = vmatprep.subr.bf16.mxu0 0
    %555 = vmatpush1.bf16.msra.mxu0 %v403
    %556 = vmatprep.subr.bf16.mxu0 0
    %557 = vmatpush1.bf16.msra.mxu0 %v404
    %558 = vmatprep.subr.bf16.mxu0 0
    %559 = vmatpush1.bf16.msra.mxu0 %v405
    %560 = vmatprep.subr.bf16.mxu0 0
    %561 = vmatpush1.bf16.msra.mxu0 %v406
    %562 = vmatprep.subr.bf16.mxu0 0
    %563 = vmatpush1.bf16.msra.mxu0 %v407
    %564 = vmatprep.subr.bf16.mxu0 0
    %565 = vmatpush1.bf16.msra.mxu0 %v408
    %566 = vmatprep.subr.bf16.mxu0 0
    %567 = vmatpush1.bf16.msra.mxu0 %v409
    %568 = vmatprep.subr.bf16.mxu0 0
    %569 = vmatpush1.bf16.msra.mxu0 %v410
    %570 = vmatprep.subr.bf16.mxu0 0
    %571 = vmatpush1.bf16.msra.mxu0 %v411
    %572 = vmatprep.mubr.bf16.mxu0 %v165
    %573 = vmatmul.mubr.bf16.gmra.mrb[0].mxu0 %v164
    %v574 = vpop.f32.mrb[0].mxu0
    %v575 = vadd.f32 %v535, %v574
    %v576 = vpop.f32.mrb[0].mxu0
    %v577 = vpop.f32.mrb[0].mxu0
    %v578 = vpop.f32.mrb[0].mxu0
    %579 = vdwg.mxu0
    %v580 = vmax.f32 %v575, 0.0
    %v581 = vpack.c.bf16 %v580, %v580
    %v582 = vld [vmem:[%s3] sm:$0xf]
    %v583 = vld [vmem:[%s3 + $0x4] sm:$0xf]
    %v584 = vld [vmem:[%s3 + $0x8] sm:$0xf]
    %v585 = vld [vmem:[%s3 + $0xc] sm:$0xf]
    %v586 = vld [vmem:[%s3 + $0x10] sm:$0xf]
    %v587 = vld [vmem:[%s3 + $0x14] sm:$0xf]
    %v588 = vld [vmem:[%s3 + $0x18] sm:$0xf]
    %v589 = vld [vmem:[%s3 + $0x1c] sm:$0xf]
    %v590 = vld [vmem:[%s3 + $0x20] sm:$0xf]
    %v591 = vld [vmem:[%s3 + $0x24] sm:$0xf]
    %v592 = vld [vmem:[%s3 + $0x28] sm:$0xf]
    %v593 = vld [vmem:[%s3 + $0x2c] sm:$0xf]
    %v594 = vld [vmem:[%s3 + $0x30] sm:$0xf]
    %v595 = vld [vmem:[%s3 + $0x34] sm:$0xf]
    %v596 = vld [vmem:[%s3 + $0x38] sm:$0xf]
    %v597 = vld [vmem:[%s3 + $0x3c] sm:$0xf]
    %v598 = vld [vmem:[%s4] sm:$0x1]
    %v600 = vlaneseq
    %v601 = vshrl.u32 %v600, 7
    %v602 = vsub.s32 0, %v601
    %v603 = vrot.slane %v598, %v602
    %v621 = vunpack.c.l.b16 %v582
    %v622 = vunpack.c.l.b16 %v583
    %v623 = vunpack.c.l.b16 %v584
    %v624 = vunpack.c.l.b16 %v585
    %v625 = vunpack.c.l.b16 %v586
    %v626 = vunpack.c.l.b16 %v587
    %v627 = vunpack.c.l.b16 %v588
    %v628 = vunpack.c.l.b16 %v589
    %v629 = vunpack.c.l.b16 %v590
    %v630 = vunpack.c.l.b16 %v591
    %v631 = vunpack.c.l.b16 %v592
    %v632 = vunpack.c.l.b16 %v593
    %v633 = vunpack.c.l.b16 %v594
    %v634 = vunpack.c.l.b16 %v595
    %v635 = vunpack.c.l.b16 %v596
    %v636 = vunpack.c.l.b16 %v597
    %v637 = vpack.c.b16 %v622, %v621
    %v638 = vpack.c.b16 %v624, %v623
    %v639 = vpack.c.b16 %v626, %v625
    %v640 = vpack.c.b16 %v628, %v627
    %v641 = vpack.c.b16 %v630, %v629
    %v642 = vpack.c.b16 %v632, %v631
    %v643 = vpack.c.b16 %v634, %v633
    %v644 = vpack.c.b16 %v636, %v635
    %653 = vmatprep.subr.bf16.mxu0 0
    %654 = vmatpush1.bf16.msra.mxu0 %v637
    %655 = vmatprep.subr.bf16.mxu0 0
    %656 = vmatpush1.bf16.msra.mxu0 %v638
    %657 = vmatprep.subr.bf16.mxu0 0
    %658 = vmatpush1.bf16.msra.mxu0 %v639
    %659 = vmatprep.subr.bf16.mxu0 0
    %660 = vmatpush1.bf16.msra.mxu0 %v640
    %661 = vmatprep.subr.bf16.mxu0 0
    %662 = vmatpush1.bf16.msra.mxu0 %v641
    %663 = vmatprep.subr.bf16.mxu0 0
    %664 = vmatpush1.bf16.msra.mxu0 %v642
    %665 = vmatprep.subr.bf16.mxu0 0
    %666 = vmatpush1.bf16.msra.mxu0 %v643
    %667 = vmatprep.subr.bf16.mxu0 0
    %668 = vmatpush1.bf16.msra.mxu0 %v644
    %669 = vmatprep.subr.bf16.mxu0 0
    %670 = vmatpush1.bf16.msra.mxu0 0
    %671 = vmatprep.subr.bf16.mxu0 0
    %672 = vmatpush1.bf16.msra.mxu0 0
    %673 = vmatprep.subr.bf16.mxu0 0
    %674 = vmatpush1.bf16.msra.mxu0 0
    %675 = vmatprep.subr.bf16.mxu0 0
    %676 = vmatpush1.bf16.msra.mxu0 0
    %677 = vmatprep.subr.bf16.mxu0 0
    %678 = vmatpush1.bf16.msra.mxu0 0
    %679 = vmatprep.subr.bf16.mxu0 0
    %680 = vmatpush1.bf16.msra.mxu0 0
    %681 = vmatprep.subr.bf16.mxu0 0
    %682 = vmatpush1.bf16.msra.mxu0 0
    %683 = vmatprep.subr.bf16.mxu0 0
    %684 = vmatpush1.bf16.msra.mxu0 0
    %685 = vmatprep.mubr.bf16.mxu0 0
    %686 = vmatmul.mubr.bf16.gmra.mrb[0].mxu0 %v581
    %v687 = vpop.f32.mrb[0].mxu0
    %v688 = vadd.f32 %v603, %v687
    %v689 = vpop.f32.mrb[0].mxu0
    %v690 = vpop.f32.mrb[0].mxu0
    %v691 = vpop.f32.mrb[0].mxu0
    %692 = vdwg.mxu0
    %v693 = vmax.f32 %v688, 0.0
    %v694 = vpack.c.bf16 %v693, %v693
    %v695 = vld [vmem:[%s5] sm:$0xf]
    %v696 = vld [vmem:[%s5 + $0x4] sm:$0xf]
    %v697 = vld [vmem:[%s5 + $0x8] sm:$0xf]
    %v698 = vld [vmem:[%s5 + $0xc] sm:$0xf]
    %v699 = vld [vmem:[%s5 + $0x10] sm:$0xf]
    %v700 = vld [vmem:[%s5 + $0x14] sm:$0xf]
    %v701 = vld [vmem:[%s5 + $0x18] sm:$0xf]
    %v702 = vld [vmem:[%s5 + $0x1c] sm:$0xf]
    %v703 = vld [vmem:[%s6] sm:$0x1]
    %v705 = vlaneseq
    %v706 = vshrl.u32 %v705, 7
    %v707 = vsub.s32 0, %v706
    %v708 = vrot.slane %v703, %v707
    %v718 = vunpack.c.l.b16 %v695
    %v719 = vunpack.c.l.b16 %v696
    %v720 = vunpack.c.l.b16 %v697
    %v721 = vunpack.c.l.b16 %v698
    %v722 = vunpack.c.l.b16 %v699
    %v723 = vunpack.c.l.b16 %v700
    %v724 = vunpack.c.l.b16 %v701
    %v725 = vunpack.c.l.b16 %v702
    %v726 = vpack.c.b16 %v719, %v718
    %v727 = vpack.c.b16 %v721, %v720
    %v728 = vpack.c.b16 %v723, %v722
    %v729 = vpack.c.b16 %v725, %v724
    %vm734 = vcmask 523264
    %v736 = vsel %vm734, %v694, 0
    %738 = vmatprep.subr.bf16.mxu0 0
    %739 = vmatpush1.bf16.msra.mxu0 %v726
    %740 = vmatprep.subr.bf16.mxu0 0
    %741 = vmatpush1.bf16.msra.mxu0 %v727
    %742 = vmatprep.subr.bf16.mxu0 0
    %743 = vmatpush1.bf16.msra.mxu0 %v728
    %744 = vmatprep.subr.bf16.mxu0 0
    %745 = vmatpush1.bf16.msra.mxu0 %v729
    %746 = vmatprep.subr.bf16.mxu0 0
    %747 = vmatpush1.bf16.msra.mxu0 0
    %748 = vmatprep.subr.bf16.mxu0 0
    %749 = vmatpush1.bf16.msra.mxu0 0
    %750 = vmatprep.subr.bf16.mxu0 0
    %751 = vmatpush1.bf16.msra.mxu0 0
    %752 = vmatprep.subr.bf16.mxu0 0
    %753 = vmatpush1.bf16.msra.mxu0 0
    %754 = vmatprep.subr.bf16.mxu0 0
    %755 = vmatpush1.bf16.msra.mxu0 0
    %756 = vmatprep.subr.bf16.mxu0 0
    %757 = vmatpush1.bf16.msra.mxu0 0
    %758 = vmatprep.subr.bf16.mxu0 0
    %759 = vmatpush1.bf16.msra.mxu0 0
    %760 = vmatprep.subr.bf16.mxu0 0
    %761 = vmatpush1.bf16.msra.mxu0 0
    %762 = vmatprep.subr.bf16.mxu0 0
    %763 = vmatpush1.bf16.msra.mxu0 0
    %764 = vmatprep.subr.bf16.mxu0 0
    %765 = vmatpush1.bf16.msra.mxu0 0
    %766 = vmatprep.subr.bf16.mxu0 0
    %767 = vmatpush1.bf16.msra.mxu0 0
    %768 = vmatprep.subr.bf16.mxu0 0
    %769 = vmatpush1.bf16.msra.mxu0 0
    %770 = vmatprep.mubr.bf16.mxu0 0
    %771 = vmatmul.mubr.bf16.gmra.mrb[0].mxu0 %v736
    %v772 = vpop.f32.mrb[0].mxu0
    %v773 = vadd.f32 %v708, %v772
    %v774 = vpop.f32.mrb[0].mxu0
    %v775 = vpop.f32.mrb[0].mxu0
    %v776 = vpop.f32.mrb[0].mxu0
    %777 = vdwg.mxu0
    %v778 = vmax.f32 %v773, 0.0
    %v779 = vpack.c.bf16 %v778, %v778
    %v780 = vld [vmem:[%s7] sm:$0xf]
    %v781 = vld [vmem:[%s7 + $0x4] sm:$0xf]
    %v782 = vld [vmem:[%s7 + $0x8] sm:$0xf]
    %v783 = vld [vmem:[%s7 + $0xc] sm:$0xf]
    %v784 = vld [vmem:[#allocation2] sm:$0x1]
    %v786 = vlaneseq
    %v787 = vshrl.u32 %v786, 7
    %v788 = vsub.s32 0, %v787
    %v789 = vrot.slane %v784, %v788
    %v795 = vunpack.c.l.b16 %v780
    %v796 = vunpack.c.l.b16 %v781
    %v797 = vunpack.c.l.b16 %v782
    %v798 = vunpack.c.l.b16 %v783
    %v799 = vpack.c.b16 %v796, %v795
    %v800 = vpack.c.b16 %v798, %v797
    %vm803 = vcmask 261120
    %v805 = vsel %vm803, %v779, 0
    %807 = vmatprep.subr.bf16.mxu0 0
    %808 = vmatpush1.bf16.msra.mxu0 %v799
    %809 = vmatprep.subr.bf16.mxu0 0
    %810 = vmatpush1.bf16.msra.mxu0 %v800
    %811 = vmatprep.subr.bf16.mxu0 0
    %812 = vmatpush1.bf16.msra.mxu0 0
    %813 = vmatprep.subr.bf16.mxu0 0
    %814 = vmatpush1.bf16.msra.mxu0 0
    %815 = vmatprep.subr.bf16.mxu0 0
    %816 = vmatpush1.bf16.msra.mxu0 0
    %817 = vmatprep.subr.bf16.mxu0 0
    %818 = vmatpush1.bf16.msra.mxu0 0
    %819 = vmatprep.subr.bf16.mxu0 0
    %820 = vmatpush1.bf16.msra.mxu0 0
    %821 = vmatprep.subr.bf16.mxu0 0
    %822 = vmatpush1.bf16.msra.mxu0 0
    %823 = vmatprep.subr.bf16.mxu0 0
    %824 = vmatpush1.bf16.msra.mxu0 0
    %825 = vmatprep.subr.bf16.mxu0 0
    %826 = vmatpush1.bf16.msra.mxu0 0
    %827 = vmatprep.subr.bf16.mxu0 0
    %828 = vmatpush1.bf16.msra.mxu0 0
    %829 = vmatprep.subr.bf16.mxu0 0
    %830 = vmatpush1.bf16.msra.mxu0 0
    %831 = vmatprep.subr.bf16.mxu0 0
    %832 = vmatpush1.bf16.msra.mxu0 0
    %833 = vmatprep.subr.bf16.mxu0 0
    %834 = vmatpush1.bf16.msra.mxu0 0
    %835 = vmatprep.subr.bf16.mxu0 0
    %836 = vmatpush1.bf16.msra.mxu0 0
    %837 = vmatprep.subr.bf16.mxu0 0
    %838 = vmatpush1.bf16.msra.mxu0 0
    %839 = vmatprep.mubr.bf16.mxu0 0
    %840 = vmatmul.mubr.bf16.gmra.mrb[0].mxu0 %v805
    %v841 = vpop.f32.mrb[0].mxu0
    %v842 = vadd.f32 %v789, %v841
    %v843 = vpop.f32.mrb[0].mxu0
    %v844 = vpop.f32.mrb[0].mxu0
    %v845 = vpop.f32.mrb[0].mxu0
    %846 = vdwg.mxu0
    %847 = vmax.xlane.f32.xlu0 %v842
    %v848 = vpop.xlane.xlu0 %847
    %v849 = vsub.f32 %v842, %v848
    %v850 = vmul.f32 %v849, 1.442695
    %v851 = vpow.pop %v850
    %852 = vadd.xlane.f32.xlu0 %v851
    %v853 = vpop.xlane.xlu0 %852
    %v854 = vlog2.pop %v853
    %v855 = vmul.f32 %v854, 0.6931472
    %v856 = vsub.f32 %v849, %v855
    %857 = vst [vmem:[%s9] sm:$0xff] %v856
    // Predicated region
    $region42: #{net_forward.1} parent=1 // pred_check
      _
    $region43: #{net_forward.1} parent=1 // pred_check_branch
      %859 = sbr.rel (0) target = $region45
    $region44: #{net_forward.1} parent=1 // pred_region
      _
    $region45: #{net_forward.1} parent=1 // pred_fallthru
      _
    // Predicated region
    $region46: #{net_forward.1} parent=1 // pred_check
      _
    $region47: #{net_forward.1} parent=1 // pred_check_branch
      %861 = sbr.rel (0) target = $region49
    $region48: #{net_forward.1} parent=1 // pred_region
      _
    $region49: #{net_forward.1} parent=1 // pred_fallthru
      _
    %862 = vsyncpa [#allocation3], 1

</llo_original>
